<compile_context>
chip_gen: v5e
topology: v5e:2x2
jax: 0.10.0
libtpu: 0.0.40
codegen_flags: <defaults>
</compile_context>

<pallas_src>
import jax
import jax.numpy as jnp
from jax import lax
from jax.experimental import pallas as pl
from jax.experimental.pallas import tpu as pltpu


ONEHOT_TOK_TILE = 128            # token rows per grid step, one-hot MXU path
GATHER_TOK_TILE = 256            # token rows per grid step, row-DMA gather paths
ONEHOT_MAX_VOCAB = 512           # beyond this the one-hot matmul wastes MXU flops
MAX_IDS_PER_GATHER_CALL = 32768  # bounds the scalar-prefetched id array in SMEM
_DMA_UNROLL = 8                  # partial unroll of DMA issue/wait loops


def _round_up(x: int, m: int) -> int:
    return ((x + m - 1) // m) * m


def _vmem_capacity_bytes() -> int:
    try:
        return int(pltpu.get_tpu_info().vmem_capacity_bytes)
    except Exception:
        return 64 * 1024 * 1024          # v7x floor; safe on every generation


def _vmem_limit_bytes() -> int:
    # ~3/4 of physical VMEM: ~48 MiB on v7x (64 MiB), ~96 MiB on v5e/v6e (128 MiB).
    return min((3 * _vmem_capacity_bytes()) // 4, 96 * 1024 * 1024)


# ---------------------------------------------------------------------------
# Small-vocab path: table resident in VMEM, gather as a (T,V)x(V,E) MXU matmul.
# ---------------------------------------------------------------------------
def _embed_onehot_kernel(ids_ref, table_ref, out_ref):
    # ids_ref:   (T, 1) int32     token ids as a column (sublane axis)
    # table_ref: (V_p, E_p)       whole padded table, resident (fetched once)
    # out_ref:   (T, E_p)
    ids_col = ids_ref[...]                                        # (T, 1)
    tok = ids_col.shape[0]
    vocab_p = table_ref.shape[0]
    # One-hot built directly in (T, V): contraction is over the lane axis of
    # the lhs, so the MXU is fed without an XLU transpose per grid step.
    col_ids = lax.broadcasted_iota(jnp.int32, (tok, vocab_p), 1)  # (T, V)
    onehot_tv = (col_ids == ids_col).astype(table_ref.dtype)      # (T, V)
    out_ref[...] = jnp.dot(
        onehot_tv, table_ref[...], preferred_element_type=jnp.float32
    ).astype(out_ref.dtype)


def _lookup_onehot(ids: jax.Array, table: jax.Array, vmem_limit: int) -> jax.Array:
    n = ids.shape[0]
    vocab_size, emb_dim = table.shape
    tile = ONEHOT_TOK_TILE
    n_pad = _round_up(max(n, 1), 2 * tile)          # even tile count (v7x: 2 TCs)
    if n_pad != n:
        ids = jnp.pad(ids, (0, n_pad - n))          # pad rows look up id 0
    vocab_p = _round_up(vocab_size, 8)
    emb_p = _round_up(emb_dim, 128)                 # lane-dense output stores
    if (vocab_p, emb_p) != (vocab_size, emb_dim):
        table = jnp.pad(table, ((0, vocab_p - vocab_size), (0, emb_p - emb_dim)))
    num_tiles = n_pad // tile
    ids_col = ids.reshape(n_pad, 1)

    grid_spec = pltpu.PrefetchScalarGridSpec(
        num_scalar_prefetch=0,
        grid=(num_tiles,),
        in_specs=[
            pl.BlockSpec((tile, 1), lambda i: (i, 0)),           # id column tile
            pl.BlockSpec((vocab_p, emb_p), lambda i: (0, 0)),    # resident table
        ],
        out_specs=pl.BlockSpec((tile, emb_p), lambda i: (i, 0)),
    )
    out = pl.pallas_call(
        _embed_onehot_kernel,
        grid_spec=grid_spec,
        out_shape=jax.ShapeDtypeStruct((n_pad, emb_p), table.dtype),
        compiler_params=pltpu.CompilerParams(
            dimension_semantics=("parallel",),
            vmem_limit_bytes=vmem_limit,
        ),
    )(ids_col, table)
    return out[:n, :emb_dim]


# ---------------------------------------------------------------------------
# Row-DMA gather kernel, shared by the resident-VMEM and HBM table paths.
# ---------------------------------------------------------------------------
def _embed_row_dma_kernel(ids_ref, table_ref, out_ref, sem):
    # ids_ref:   (chunk,) int32 in SMEM (scalar prefetch)
    # table_ref: (V_p, W) either HBM (memory_space=pl.ANY) or a resident VMEM block
    # out_ref:   (T, W)   rows are DMA'd straight into the output block
    # sem:       single DMA semaphore; all row copies signal it, waits drain it
    tok = out_ref.shape[0]
    base = pl.multiple_of(pl.program_id(0) * tok, tok)

    def _start(r, carry):
        rid = ids_ref[base + r]
        pltpu.make_async_copy(
            table_ref.at[pl.ds(rid, 1), :],
            out_ref.at[pl.ds(r, 1), :],
            sem.at[0],
        ).start()
        return carry

    def _wait(r, carry):
        # Dummy source row 0: only the semaphore and the (identical) transfer
        # size matter for the wait.
        pltpu.make_async_copy(
            table_ref.at[pl.ds(0, 1), :],
            out_ref.at[pl.ds(r, 1), :],
            sem.at[0],
        ).wait()
        return carry

    # Issue every row DMA for this tile before waiting on any of them, so the
    # DMA engine always has `tok` copies in flight (latency fully hidden).
    lax.fori_loop(0, tok, _start, 0, unroll=_DMA_UNROLL)
    lax.fori_loop(0, tok, _wait, 0, unroll=_DMA_UNROLL)


def _gather_chunk(ids_chunk: jax.Array, table_p: jax.Array,
                  resident: bool, vmem_limit: int) -> jax.Array:
    n_pad = ids_chunk.shape[0]
    vocab_p, width = table_p.shape
    tile = GATHER_TOK_TILE
    num_tiles = n_pad // tile

    if resident:
        # Constant index_map: table is DMA'd into VMEM once and revisited.
        table_spec = pl.BlockSpec((vocab_p, width), lambda i, ids: (0, 0))
    else:
        # Table stays in HBM; rows are gathered with per-row HBM DMAs.
        table_spec = pl.BlockSpec(memory_space=pl.ANY)

    grid_spec = pltpu.PrefetchScalarGridSpec(
        num_scalar_prefetch=1,                               # ids land in SMEM
        grid=(num_tiles,),
        in_specs=[table_spec],
        out_specs=pl.BlockSpec((tile, width), lambda i, ids: (i, 0)),
        scratch_shapes=[pltpu.SemaphoreType.DMA((1,))],
    )
    return pl.pallas_call(
        _embed_row_dma_kernel,
        grid_spec=grid_spec,
        out_shape=jax.ShapeDtypeStruct((n_pad, width), table_p.dtype),
        compiler_params=pltpu.CompilerParams(
            dimension_semantics=("parallel",),
            vmem_limit_bytes=vmem_limit,
        ),
    )(ids_chunk, table_p)


def _lookup_gather(ids: jax.Array, table: jax.Array,
                   resident: bool, vmem_limit: int) -> jax.Array:
    n = ids.shape[0]
    vocab_size, emb_dim = table.shape
    dtype = table.dtype
    itemsize = jnp.dtype(dtype).itemsize
    pack = 4 // itemsize if itemsize in (1, 2) else 1

    vocab_p = _round_up(vocab_size, 8)
    emb_p = _round_up(emb_dim, 128 * pack)          # lane-dense after repacking
    table_p = table
    if (vocab_p, emb_p) != (vocab_size, emb_dim):
        table_p = jnp.pad(table, ((0, vocab_p - vocab_size), (0, emb_p - emb_dim)))
    if pack > 1:
        # Repack sub-32-bit rows as uint32 so every single-row DMA stays dense.
        table_p = lax.bitcast_convert_type(
            table_p.reshape(vocab_p, emb_p // pack, pack), jnp.uint32)

    tile = GATHER_TOK_TILE
    outs = []
    for start in range(0, n, MAX_IDS_PER_GATHER_CALL):
        ids_c = ids[start:start + MAX_IDS_PER_GATHER_CALL]
        n_c = ids_c.shape[0]
        n_c_pad = _round_up(n_c, 2 * tile)          # even tile count (v7x: 2 TCs)
        if n_c_pad != n_c:
            ids_c = jnp.pad(ids_c, (0, n_c_pad - n_c))
        out_c = _gather_chunk(ids_c, table_p, resident, vmem_limit)
        outs.append(out_c[:n_c])
    out = outs[0] if len(outs) == 1 else jnp.concatenate(outs, axis=0)

    if pack > 1:
        out = lax.bitcast_convert_type(out, dtype).reshape(out.shape[0], emb_p)
    return out[:, :emb_dim]


# ---------------------------------------------------------------------------
# Module-equivalent forward.
# ---------------------------------------------------------------------------
def embedding_forward(x: jax.Array, emb_table: jax.Array, *,
                      force_path: str | None = None) -> jax.Array:
    """Equivalent of `embedding.forward(x)`: integer ids [...] -> [..., emb_dim]."""
    vocab_size, emb_dim = emb_table.shape
    lead_shape = x.shape

    ids = x.reshape(-1)
    if ids.dtype != jnp.int32:
        ids = ids.astype(jnp.int32)
    # Clamp instead of raising on out-of-range ids (see TODO at top of file).
    ids = jnp.clip(ids, 0, vocab_size - 1)
    n = ids.shape[0]
    if n == 0:
        return jnp.zeros(lead_shape + (emb_dim,), emb_table.dtype)

    vmem_limit = _vmem_limit_bytes()
    itemsize = jnp.dtype(emb_table.dtype).itemsize
    pack = 4 // itemsize if itemsize in (1, 2) else 1
    vocab_p = _round_up(vocab_size, 8)
    emb_p = _round_up(emb_dim, 128 * pack)
    table_bytes = vocab_p * emb_p * itemsize
    gather_tile_bytes = GATHER_TOK_TILE * (emb_p // pack) * 4
    # 2x table (Pallas double-buffers the constant-index block) + double-buffered
    # output tiles + headroom must fit the per-generation VMEM limit.
    resident_ok = (2 * table_bytes + 4 * gather_tile_bytes + (1 << 20)) <= vmem_limit
    onehot_ok = (jnp.issubdtype(emb_table.dtype, jnp.floating)
                 and vocab_p <= ONEHOT_MAX_VOCAB and resident_ok)

    path = force_path
    if path is None:
        path = "onehot" if onehot_ok else ("resident" if resident_ok else "hbm")

    if path == "onehot":
        out = _lookup_onehot(ids, emb_table, vmem_limit)
    elif path == "resident":
        out = _lookup_gather(ids, emb_table, resident=True, vmem_limit=vmem_limit)
    elif path == "hbm":
        out = _lookup_gather(ids, emb_table, resident=False, vmem_limit=vmem_limit)
    else:
        raise ValueError(f"unknown path {path!r}")
    return out.reshape(lead_shape + (emb_dim,))


if __name__ == "__main__":
    # Small shapes consistent with the module's forward pass.
    vocab_size, emb_dim = 32, 128
    batch, seq = 2, 8

    key = jax.random.PRNGKey(0)
    k_w, k_x = jax.random.split(key)

    # nn.Embedding default init is N(0, 1).
    emb_table = jax.random.normal(k_w, (vocab_size, emb_dim), dtype=jnp.float32)
    x = jax.random.randint(k_x, (batch, seq), minval=0, maxval=vocab_size,
                           dtype=jnp.int32)

    ref = emb_table[x]                               # plain JAX gather reference

    # Default dispatch: small float vocab -> resident one-hot MXU path.
    out = jax.block_until_ready(embedding_forward(x, emb_table))
    assert out.shape == (batch, seq, emb_dim)
    assert jnp.allclose(out, ref, atol=1e-5)

    # Resident-table (VMEM) per-row DMA gather path (exact).
    out_res = jax.block_until_ready(
        embedding_forward(x, emb_table, force_path="resident"))
    assert jnp.allclose(out_res, ref)

    # HBM per-row DMA gather path (exact).
    out_hbm = jax.block_until_ready(
        embedding_forward(x, emb_table, force_path="hbm"))
    assert jnp.allclose(out_hbm, ref)

    # bf16 table exercises the uint32 row-repacking in the gather path.
    table_bf16 = emb_table.astype(jnp.bfloat16)
    ref_bf16 = table_bf16[x]
    out_bf16 = jax.block_until_ready(
        embedding_forward(x, table_bf16, force_path="hbm"))
    assert jnp.array_equal(out_bf16, ref_bf16)

    print("KERNEL_OK")
</pallas_src>

<mosaic_0001>
module attributes {stable_mosaic.version = 11 : i64} {
  func.func @_embed_onehot_kernel(%arg0: i32, %arg1: memref<128x1xi32, #tpu.memory_space<vmem>>, %arg2: memref<32x128xf32, #tpu.memory_space<vmem>>, %arg3: memref<128x128xf32, #tpu.memory_space<vmem>>) attributes {dimension_semantics = [#tpu.dimension_semantics<parallel>], iteration_bounds = array<i64: 2>, scalar_prefetch = 0 : i64, scratch_operands = 0 : i64, tpu.core_type = #tpu.core_type<tc>, window_params = [{transform_indices = @transform_0, window_bounds = array<i64: 128, 1>}, {pipeline_mode = #tpu.pipeline_mode<synchronous>, transform_indices = @transform_1, window_bounds = array<i64: 32, 128>}, {transform_indices = @transform_2, window_bounds = array<i64: 128, 128>}]} {
    %c0 = arith.constant 0 : index
    %c0_0 = arith.constant 0 : index
    %0 = vector.load %arg1[%c0, %c0_0] : memref<128x1xi32, #tpu.memory_space<vmem>>, vector<128x1xi32>
    %1 = tpu.iota {dimensions = array<i32: 1>} : vector<128x32xi32>
    %2 = vector.broadcast %0 : vector<128x1xi32> to vector<128x32xi32>
    %3 = arith.cmpi eq, %1, %2 : vector<128x32xi32>
    %4 = arith.extui %3 : vector<128x32xi1> to vector<128x32xi32>
    %5 = arith.sitofp %4 : vector<128x32xi32> to vector<128x32xf32>
    %c0_1 = arith.constant 0 : index
    %c0_2 = arith.constant 0 : index
    %6 = vector.load %arg2[%c0_1, %c0_2] : memref<32x128xf32, #tpu.memory_space<vmem>>, vector<32x128xf32>
    %cst = arith.constant dense<0.000000e+00> : vector<128x128xf32>
    %7 = tpu.matmul %5, %6, %cst {dimension_numbers = #tpu.dot_dimension_numbers<[1], [0], [0], [1], [0, 0, 1, 1], [], []>} : vector<128x32xf32>, vector<32x128xf32>, vector<128x128xf32> -> vector<128x128xf32>
    %c0_3 = arith.constant 0 : index
    %c0_4 = arith.constant 0 : index
    %8 = vector.load %arg3[%c0_3, %c0_4] : memref<128x128xf32, #tpu.memory_space<vmem>>, vector<128x128xf32>
    tpu.vector_store %arg3[%c0_3, %c0_4], %7 {strides = array<i32>} : memref<128x128xf32, #tpu.memory_space<vmem>>, vector<128x128xf32>,
    return
  }
  func.func @transform_0(%arg0: i32) -> (i32, i32) {
    %c0_i32 = arith.constant 0 : i32
    %c0_i32_0 = arith.constant 0 : i32
    return %arg0, %c0_i32 : i32, i32
  }
  func.func @transform_1(%arg0: i32) -> (i32, i32) {
    %c0_i32 = arith.constant 0 : i32
    %c0_i32_0 = arith.constant 0 : i32
    %c0_i32_1 = arith.constant 0 : i32
    return %c0_i32, %c0_i32_0 : i32, i32
  }
  func.func @transform_2(%arg0: i32) -> (i32, i32) {
    %c0_i32 = arith.constant 0 : i32
    %c0_i32_0 = arith.constant 0 : i32
    return %arg0, %c0_i32 : i32, i32
  }
}

</mosaic_0001>

<llo_original>
// kernel: tpu_custom_call.1
$region0: #{tpu_custom_call.1}
  #allocation0 [shape = 'u32[]', space=smem, size = 0x4, offset = 0x4, fixed_abs, tag = 'smem constant byte address 0x4 - core index']
  #allocation1 [shape = 'u32[72,128]{1,0:T(1,128)}', space=vmem, size = 0x9000, scoped, tag = 'internal scratch']
  %s0 = inlined_call_operand.vmem [shape: s32[256,1], index: 0, kind: input, shape index: {}]
  %s1 = inlined_call_operand.vmem [shape: f32[32,128], index: 1, kind: input, shape index: {}]
  %s2 = inlined_call_operand.hbm [shape: f32[256,128], index: 2, kind: output, shape index: {}]
  %s3 = sld [smem:[#allocation0]]
  $region41: #{tpu_custom_call.1} parent=0
    _
  %s5 = ssub.s32 1, %s3
  %s6 = scalar_select 0, %s5, %s3
  $region1: #{tpu_custom_call.1} parent=0
    #allocation2 [shape = 'u8[131072]{0}', space=vmem, size = 0x20000, scoped, tag = 'output window, operand 0']
    #allocation3 [shape = 's32[2]{0}', space=sflag, size = 0x8, scoped, tag = 'scoped memory for tpu_custom_call.1']
    %7 = vsyncpa [#allocation3], 0
    %s8 = scalar_lea.sflag [#allocation3], 1
    %9 = vsyncpa %s8, 0
    loop: start=0, step=1, limit=4
    $region2: #{tpu_custom_call.1} parent=1 // loop_pre_header
      _
    $region3: #{tpu_custom_call.1} parent=1 // loop_header
      %s11 = sphi 0, %s15
      %p12 = scmp.ge.s32.totalorder %s11, 4
      %s21 = sphi 0, %s23
      %s24 = sphi 0, %s21
      %s25 = sphi 0, %s24
      %s41 = sphi 0, %s25
      %s45 = sphi 0, %s45
      %s47 = sphi 0, %s45
      %s48 = sphi 0, %s47
      %s62 = sphi 0, %s48
      %s68 = sphi 0, %s70
      %s71 = sphi 0, %s68
      %s72 = sphi 0, %s71
      %s88 = sphi 0, %s72
    $region4: #{tpu_custom_call.1} parent=1 // loop_header_branch
      %14 = sbr.rel (%p12) target = $region8
    $region5: #{tpu_custom_call.1} parent=1 // loop_body
      %s16 = ssub.s32 %s11, 1
      %s17 = ssub.s32 %s11, 2
      %s18 = sadd.s32 %s11, 1
      %s19 = ssub.s32 %s11, %s18
      %p20 = scmp.eq.s32.totalorder %s19, 0
      %s22 = sadd.s32 %s21, 1
      %s23 = scalar_select %p20, %s21, %s22
      %p26 = pneg %p20
      %p27 = scmp.eq.s32.totalorder %s11, 1
      %p28 = por %p26, %p27
      %p29 = scmp.ne.s32.totalorder %s21, %s24
      %p30 = scmp.eq.s32.totalorder %s11, 0
      %p31 = por %p29, %p30
      %p32 = scmp.ne.s32.totalorder %s21, %s24
      %p33 = scmp.eq.s32.totalorder %s16, 1
      %p34 = por %p32, %p33
      %p35 = scmp.ne.s32.totalorder %s24, %s25
      %p36 = scmp.eq.s32.totalorder %s16, 0
      %p37 = por %p35, %p36
      %p38 = scmp.ne.s32.totalorder %s24, %s25
      %p39 = scmp.eq.s32.totalorder %s17, 1
      %p40 = por %p38, %p39
      %p42 = scmp.ne.s32.totalorder %s25, %s41
      %p43 = scmp.eq.s32.totalorder %s17, 0
      %p44 = por %p42, %p43
      %s46 = sadd.s32 %s45, 1
      %p49 = scmp.eq.s32.totalorder %s11, 1
      %p50 = scmp.ne.s32.totalorder %s45, %s47
      %p51 = scmp.eq.s32.totalorder %s11, 0
      %p52 = por %p50, %p51
      %p53 = scmp.ne.s32.totalorder %s45, %s47
      %p54 = scmp.eq.s32.totalorder %s16, 1
      %p55 = por %p53, %p54
      %p56 = scmp.ne.s32.totalorder %s47, %s48
      %p57 = scmp.eq.s32.totalorder %s16, 0
      %p58 = por %p56, %p57
      %p59 = scmp.ne.s32.totalorder %s47, %s48
      %p60 = scmp.eq.s32.totalorder %s17, 1
      %p61 = por %p59, %p60
      %p63 = scmp.ne.s32.totalorder %s48, %s62
      %p64 = scmp.eq.s32.totalorder %s17, 0
      %p65 = por %p63, %p64
      %s66 = ssub.s32 %s11, %s18
      %p67 = scmp.eq.s32.totalorder %s66, 0
      %s69 = sadd.s32 %s68, 1
      %s70 = scalar_select %p67, %s68, %s69
      %p73 = pneg %p67
      %p74 = scmp.eq.s32.totalorder %s11, 1
      %p75 = por %p73, %p74
      %p76 = scmp.ne.s32.totalorder %s68, %s71
      %p77 = scmp.eq.s32.totalorder %s11, 0
      %p78 = por %p76, %p77
      %p79 = scmp.ne.s32.totalorder %s68, %s71
      %p80 = scmp.eq.s32.totalorder %s16, 1
      %p81 = por %p79, %p80
      %p82 = scmp.ne.s32.totalorder %s71, %s72
      %p83 = scmp.eq.s32.totalorder %s16, 0
      %p84 = por %p82, %p83
      %p85 = scmp.ne.s32.totalorder %s71, %s72
      %p86 = scmp.eq.s32.totalorder %s17, 1
      %p87 = por %p85, %p86
      %p89 = scmp.ne.s32.totalorder %s72, %s88
      %p90 = scmp.eq.s32.totalorder %s17, 0
      %p91 = por %p89, %p90
      %p92 = scmp.le.s32.totalorder 1, %s11
      %p93 = scmp.lt.s32.totalorder %s11, 3
      %p94 = pnand %p92, %p93
      %p95 = pneg %p94
      // Predicated region
      $region9: #{tpu_custom_call.1} parent=5 // pred_check
        _
      $region10: #{tpu_custom_call.1} parent=5 // pred_check_branch
        %97 = sbr.rel (%p94) target = $region12
      $region11: #{tpu_custom_call.1} parent=5 // pred_region
        %s98 = ssub.s32 %s11, 1
        // Predicated region
        $region13: #{tpu_custom_call.1} parent=11 // pred_check
          %p99 = pneg %p58
        $region14: #{tpu_custom_call.1} parent=11 // pred_check_branch
          %101 = sbr.rel (%p99) target = $region16
        $region15: #{tpu_custom_call.1} parent=11 // pred_region
          _
        $region16: #{tpu_custom_call.1} parent=11 // pred_fallthru
          _
      $region12: #{tpu_custom_call.1} parent=5 // pred_fallthru
        _
      %p102 = scmp.lt.s32.totalorder %s11, 2
      // Predicated region
      $region17: #{tpu_custom_call.1} parent=5 // pred_check
        %p103 = pneg %p102
      $region18: #{tpu_custom_call.1} parent=5 // pred_check_branch
        %105 = sbr.rel (%p103) target = $region20
      $region19: #{tpu_custom_call.1} parent=5 // pred_region
        // Predicated region
        $region21: #{tpu_custom_call.1} parent=19 // pred_check
          %p106 = pneg %p31
        $region22: #{tpu_custom_call.1} parent=19 // pred_check_branch
          %108 = sbr.rel (%p106) target = $region24
        $region23: #{tpu_custom_call.1} parent=19 // pred_region
          %s109 = smul.u32 16, %s11
          %p110 = scmp.lt.s32.totalorder %s109, 31
          %s111 = scalar_select %p110, %s109, 31
          %s112 = smul.addr %s111, 8
          %s113 = scalar_lea.vmem %s0, %s112
          %s114 = smul.u32 16, %s11
        $region24: #{tpu_custom_call.1} parent=19 // pred_fallthru
          _
      $region20: #{tpu_custom_call.1} parent=5 // pred_fallthru
        _
      %p115 = scmp.le.s32.totalorder 1, %s11
      %p116 = scmp.lt.s32.totalorder %s11, 3
      %p117 = pnand %p115, %p116
      %p118 = pneg %p117
      // Predicated region
      $region25: #{tpu_custom_call.1} parent=5 // pred_check
        _
      $region26: #{tpu_custom_call.1} parent=5 // pred_check_branch
        %120 = sbr.rel (%p117) target = $region28
      $region27: #{tpu_custom_call.1} parent=5 // pred_region
        %s121 = ssub.s32 %s11, 1
        %s122 = smul.u32 16, %s16
        %p123 = scmp.lt.s32.totalorder %s122, 31
        %s124 = scalar_select %p123, %s122, 31
        %s125 = smul.addr %s124, 8
        %s126 = scalar_lea.vmem %s0, %s125
        %p127 = pneg %p37
        %p128 = pneg %p34
        %p129 = pneg %p58
        %p130 = pneg %p55
        %p131 = pneg %p84
        %p132 = pneg %p81
        %s133 = sand.u32 %s71, 1
        %s134 = scalar_lea.sflag [#allocation3], %s133
        %s135 = sand.u32 %s71, 1
        %s136 = smul.addr %s135, 128
        %s137 = scalar_lea.vmem [#allocation2], %s136
        %s138 = smul.u32 16, %s16
        %p139 = scmp.lt.s32.totalorder %s138, 31
        %s140 = scalar_select %p139, %s138, 31
        %s141 = smul.addr %s140, 8
        %s142 = scalar_lea.vmem %s0, %s141
        %s143 = smul.u32 16, %s16
        %s144 = smul.u32 16, %s16
        %v145 = vld [vmem:[%s142] sm:$0xff]
        %v146 = vld [vmem:[%s142 + $0x8] sm:$0xff]
        %v147 = vld [vmem:[%s142 + $0x10] sm:$0xff]
        %v148 = vld [vmem:[%s142 + $0x18] sm:$0xff]
        %v149 = vld [vmem:[%s142 + $0x20] sm:$0xff]
        %v150 = vld [vmem:[%s142 + $0x28] sm:$0xff]
        %v151 = vld [vmem:[%s142 + $0x30] sm:$0xff]
        %v152 = vld [vmem:[%s142 + $0x38] sm:$0xff]
        %v153 = vld [vmem:[%s142 + $0x40] sm:$0xff]
        %v154 = vld [vmem:[%s142 + $0x48] sm:$0xff]
        %v155 = vld [vmem:[%s142 + $0x50] sm:$0xff]
        %v156 = vld [vmem:[%s142 + $0x58] sm:$0xff]
        %v157 = vld [vmem:[%s142 + $0x60] sm:$0xff]
        %v158 = vld [vmem:[%s142 + $0x68] sm:$0xff]
        %v159 = vld [vmem:[%s142 + $0x70] sm:$0xff]
        %v160 = vld [vmem:[%s142 + $0x78] sm:$0xff]
        %v161 = vlaneseq
        %v162 = vand.u32 %v161, 127
        %163 = vset.pattern.permute.xlu0 0
        %164 = vperm.xlu0 %163, %v145
        %v165 = vpop.permute.xlu0 %164
        %166 = vset.pattern.permute.xlu0 0
        %167 = vperm.xlu0 %166, %v146
        %v168 = vpop.permute.xlu0 %167
        %169 = vset.pattern.permute.xlu0 0
        %170 = vperm.xlu0 %169, %v147
        %v171 = vpop.permute.xlu0 %170
        %172 = vset.pattern.permute.xlu0 0
        %173 = vperm.xlu0 %172, %v148
        %v174 = vpop.permute.xlu0 %173
        %175 = vset.pattern.permute.xlu0 0
        %176 = vperm.xlu0 %175, %v149
        %v177 = vpop.permute.xlu0 %176
        %178 = vset.pattern.permute.xlu0 0
        %179 = vperm.xlu0 %178, %v150
        %v180 = vpop.permute.xlu0 %179
        %181 = vset.pattern.permute.xlu0 0
        %182 = vperm.xlu0 %181, %v151
        %v183 = vpop.permute.xlu0 %182
        %184 = vset.pattern.permute.xlu0 0
        %185 = vperm.xlu0 %184, %v152
        %v186 = vpop.permute.xlu0 %185
        %187 = vset.pattern.permute.xlu0 0
        %188 = vperm.xlu0 %187, %v153
        %v189 = vpop.permute.xlu0 %188
        %190 = vset.pattern.permute.xlu0 0
        %191 = vperm.xlu0 %190, %v154
        %v192 = vpop.permute.xlu0 %191
        %193 = vset.pattern.permute.xlu0 0
        %194 = vperm.xlu0 %193, %v155
        %v195 = vpop.permute.xlu0 %194
        %196 = vset.pattern.permute.xlu0 0
        %197 = vperm.xlu0 %196, %v156
        %v198 = vpop.permute.xlu0 %197
        %199 = vset.pattern.permute.xlu0 0
        %200 = vperm.xlu0 %199, %v157
        %v201 = vpop.permute.xlu0 %200
        %202 = vset.pattern.permute.xlu0 0
        %203 = vperm.xlu0 %202, %v158
        %v204 = vpop.permute.xlu0 %203
        %205 = vset.pattern.permute.xlu0 0
        %206 = vperm.xlu0 %205, %v159
        %v207 = vpop.permute.xlu0 %206
        %208 = vset.pattern.permute.xlu0 0
        %209 = vperm.xlu0 %208, %v160
        %v210 = vpop.permute.xlu0 %209
        %vm211 = vcmp.eq.s32.totalorder %v162, %v165
        %vm212 = vcmp.eq.s32.totalorder %v162, %v168
        %vm213 = vcmp.eq.s32.totalorder %v162, %v171
        %vm214 = vcmp.eq.s32.totalorder %v162, %v174
        %vm215 = vcmp.eq.s32.totalorder %v162, %v177
        %vm216 = vcmp.eq.s32.totalorder %v162, %v180
        %vm217 = vcmp.eq.s32.totalorder %v162, %v183
        %vm218 = vcmp.eq.s32.totalorder %v162, %v186
        %vm219 = vcmp.eq.s32.totalorder %v162, %v189
        %vm220 = vcmp.eq.s32.totalorder %v162, %v192
        %vm221 = vcmp.eq.s32.totalorder %v162, %v195
        %vm222 = vcmp.eq.s32.totalorder %v162, %v198
        %vm223 = vcmp.eq.s32.totalorder %v162, %v201
        %vm224 = vcmp.eq.s32.totalorder %v162, %v204
        %vm225 = vcmp.eq.s32.totalorder %v162, %v207
        %vm226 = vcmp.eq.s32.totalorder %v162, %v210
        %v227 = vsel %vm211, 1, 0
        %v228 = vsel %vm212, 1, 0
        %v229 = vsel %vm213, 1, 0
        %v230 = vsel %vm214, 1, 0
        %v231 = vsel %vm215, 1, 0
        %v232 = vsel %vm216, 1, 0
        %v233 = vsel %vm217, 1, 0
        %v234 = vsel %vm218, 1, 0
        %v235 = vsel %vm219, 1, 0
        %v236 = vsel %vm220, 1, 0
        %v237 = vsel %vm221, 1, 0
        %v238 = vsel %vm222, 1, 0
        %v239 = vsel %vm223, 1, 0
        %v240 = vsel %vm224, 1, 0
        %v241 = vsel %vm225, 1, 0
        %v242 = vsel %vm226, 1, 0
        %v243 = vcvt.s32.f32 %v227
        %v244 = vcvt.s32.f32 %v228
        %v245 = vcvt.s32.f32 %v229
        %v246 = vcvt.s32.f32 %v230
        %v247 = vcvt.s32.f32 %v231
        %v248 = vcvt.s32.f32 %v232
        %v249 = vcvt.s32.f32 %v233
        %v250 = vcvt.s32.f32 %v234
        %v251 = vcvt.s32.f32 %v235
        %v252 = vcvt.s32.f32 %v236
        %v253 = vcvt.s32.f32 %v237
        %v254 = vcvt.s32.f32 %v238
        %v255 = vcvt.s32.f32 %v239
        %v256 = vcvt.s32.f32 %v240
        %v257 = vcvt.s32.f32 %v241
        %v258 = vcvt.s32.f32 %v242
        %v259 = vld [vmem:[%s1] sm:$0xff]
        %v260 = vld [vmem:[%s1 + $0x8] sm:$0xff]
        %v261 = vld [vmem:[%s1 + $0x10] sm:$0xff]
        %v262 = vld [vmem:[%s1 + $0x18] sm:$0xff]
        %vm263 = vcmask 261120
        %v265 = vsel %vm263, %v243, 0
        %v268 = vsel %vm263, %v244, 0
        %v271 = vsel %vm263, %v245, 0
        %v274 = vsel %vm263, %v246, 0
        %v277 = vsel %vm263, %v247, 0
        %v280 = vsel %vm263, %v248, 0
        %v283 = vsel %vm263, %v249, 0
        %v286 = vsel %vm263, %v250, 0
        %v289 = vsel %vm263, %v251, 0
        %v292 = vsel %vm263, %v252, 0
        %v295 = vsel %vm263, %v253, 0
        %v298 = vsel %vm263, %v254, 0
        %v301 = vsel %vm263, %v255, 0
        %v304 = vsel %vm263, %v256, 0
        %v307 = vsel %vm263, %v257, 0
        %v310 = vsel %vm263, %v258, 0
        %312 = vmatpush.msra.mxu0 0.0
        %313 = vmatpush.msra.mxu0 0.0
        %314 = vmatpush.msra.mxu0 0.0
        %315 = vmatpush.msra.mxu0 0.0
        %316 = vmatpush.msra.mxu0 0.0
        %317 = vmatpush.msra.mxu0 0.0
        %318 = vmatpush.msra.mxu0 0.0
        %319 = vmatpush.msra.mxu0 0.0
        %320 = vmatpush.msra.mxu0 0.0
        %321 = vmatpush.msra.mxu0 0.0
        %322 = vmatpush.msra.mxu0 0.0
        %323 = vmatpush.msra.mxu0 0.0
        %324 = vmatpush.msra.mxu0 %v262
        %325 = vmatpush.msra.mxu0 %v261
        %326 = vmatpush.msra.mxu0 %v260
        %327 = vmatpush.msra.mxu0 %v259
        %328 = vmatmul.f32.gmra.mxu0 %v265
        %v329 = vpop.f32.mrf.mxu0
        %v330 = vadd.f32 0.0, %v329
        %331 = vmatmul.f32.gmra.mxu0 %v268
        %v332 = vpop.f32.mrf.mxu0
        %v333 = vadd.f32 0.0, %v332
        %334 = vmatmul.f32.gmra.mxu0 %v271
        %v335 = vpop.f32.mrf.mxu0
        %v336 = vadd.f32 0.0, %v335
        %337 = vmatmul.f32.gmra.mxu0 %v274
        %v338 = vpop.f32.mrf.mxu0
        %v339 = vadd.f32 0.0, %v338
        %340 = vmatmul.f32.gmra.mxu0 %v277
        %v341 = vpop.f32.mrf.mxu0
        %v342 = vadd.f32 0.0, %v341
        %343 = vmatmul.f32.gmra.mxu0 %v280
        %v344 = vpop.f32.mrf.mxu0
        %v345 = vadd.f32 0.0, %v344
        %346 = vmatmul.f32.gmra.mxu0 %v283
        %v347 = vpop.f32.mrf.mxu0
        %v348 = vadd.f32 0.0, %v347
        %349 = vmatmul.f32.gmra.mxu0 %v286
        %v350 = vpop.f32.mrf.mxu0
        %v351 = vadd.f32 0.0, %v350
        %352 = vmatmul.f32.gmra.mxu0 %v289
        %v353 = vpop.f32.mrf.mxu0
        %v354 = vadd.f32 0.0, %v353
        %355 = vmatmul.f32.gmra.mxu0 %v292
        %v356 = vpop.f32.mrf.mxu0
        %v357 = vadd.f32 0.0, %v356
        %358 = vmatmul.f32.gmra.mxu0 %v295
        %v359 = vpop.f32.mrf.mxu0
        %v360 = vadd.f32 0.0, %v359
        %361 = vmatmul.f32.gmra.mxu0 %v298
        %v362 = vpop.f32.mrf.mxu0
        %v363 = vadd.f32 0.0, %v362
        %364 = vmatmul.f32.gmra.mxu0 %v301
        %v365 = vpop.f32.mrf.mxu0
        %v366 = vadd.f32 0.0, %v365
        %367 = vmatmul.f32.gmra.mxu0 %v304
        %v368 = vpop.f32.mrf.mxu0
        %v369 = vadd.f32 0.0, %v368
        %370 = vmatmul.f32.gmra.mxu0 %v307
        %v371 = vpop.f32.mrf.mxu0
        %v372 = vadd.f32 0.0, %v371
        %373 = vmatmul.f32.gmra.mxu0 %v310
        %v374 = vpop.f32.mrf.mxu0
        %v375 = vadd.f32 0.0, %v374
        %376 = vdwg.mxu0
        %377 = vst [vmem:[%s137] sm:$0xff] %v330
        %378 = vst [vmem:[%s137 + $0x8] sm:$0xff] %v333
        %379 = vst [vmem:[%s137 + $0x10] sm:$0xff] %v336
        %380 = vst [vmem:[%s137 + $0x18] sm:$0xff] %v339
        %381 = vst [vmem:[%s137 + $0x20] sm:$0xff] %v342
        %382 = vst [vmem:[%s137 + $0x28] sm:$0xff] %v345
        %383 = vst [vmem:[%s137 + $0x30] sm:$0xff] %v348
        %384 = vst [vmem:[%s137 + $0x38] sm:$0xff] %v351
        %385 = vst [vmem:[%s137 + $0x40] sm:$0xff] %v354
        %386 = vst [vmem:[%s137 + $0x48] sm:$0xff] %v357
        %387 = vst [vmem:[%s137 + $0x50] sm:$0xff] %v360
        %388 = vst [vmem:[%s137 + $0x58] sm:$0xff] %v363
        %389 = vst [vmem:[%s137 + $0x60] sm:$0xff] %v366
        %390 = vst [vmem:[%s137 + $0x68] sm:$0xff] %v369
        %391 = vst [vmem:[%s137 + $0x70] sm:$0xff] %v372
        %392 = vst [vmem:[%s137 + $0x78] sm:$0xff] %v375
        %s393 = sand.u32 %s71, 1
        %s394 = scalar_lea.sflag [#allocation3], %s393
        %s395 = sand.u32 %s71, 1
        %s396 = smul.addr %s395, 128
        %s397 = scalar_lea.vmem [#allocation2], %s396
        // Predicated region
        $region29: #{tpu_custom_call.1} parent=27 // pred_check
          %p398 = pneg %p81
        $region30: #{tpu_custom_call.1} parent=27 // pred_check_branch
          %400 = sbr.rel (%p398) target = $region32
        $region31: #{tpu_custom_call.1} parent=27 // pred_region
          %s401 = smul.u32 16, %s16
          %403 = vsyncadd %s394, 0
          %s404 = smul.addr %s401, 8
          %s405 = scalar_lea.hbm %s2, %s404
          %s406 = sshll.u32 %s397, 4
          %s407 = int_to_ptr.vmem [resolvable:$true] %s406
          %s408 = sshll.u32 %s405, 4
          %s409 = int_to_ptr.hbm [resolvable:$true] %s408
          %414 = dma.vmem_to_hbm [thread:$0]  %s407, 2048, %s409, %s394, 128, 128, 8
        $region32: #{tpu_custom_call.1} parent=27 // pred_fallthru
          _
      $region28: #{tpu_custom_call.1} parent=5 // pred_fallthru
        _
      %p415 = scmp.le.s32.totalorder 2, %s11
      // Predicated region
      $region33: #{tpu_custom_call.1} parent=5 // pred_check
        %p416 = pneg %p415
      $region34: #{tpu_custom_call.1} parent=5 // pred_check_branch
        %418 = sbr.rel (%p416) target = $region36
      $region35: #{tpu_custom_call.1} parent=5 // pred_region
        %s419 = ssub.s32 %s11, 2
        // Predicated region
        $region37: #{tpu_custom_call.1} parent=35 // pred_check
          %p420 = pneg %p87
        $region38: #{tpu_custom_call.1} parent=35 // pred_check_branch
          %422 = sbr.rel (%p420) target = $region40
        $region39: #{tpu_custom_call.1} parent=35 // pred_region
          %s423 = sand.u32 %s72, 1
          %s424 = scalar_lea.sflag [#allocation3], %s423
          %s425 = sand.u32 %s72, 1
          %s426 = smul.addr %s425, 128
          %s427 = scalar_lea.vmem [#allocation2], %s426
          %429 = dma.done %s424, 2048
        $region40: #{tpu_custom_call.1} parent=35 // pred_fallthru
          _
      $region36: #{tpu_custom_call.1} parent=5 // pred_fallthru
        _
    $region6: #{tpu_custom_call.1} parent=1 // loop_footer
      %s15 = sadd.s32 1, %s11
    $region7: #{tpu_custom_call.1} parent=1 // loop_footer_branch
      %10 = sbr.rel target = $region3
    $region8: #{tpu_custom_call.1} parent=1 // loop_exit
      _
    %430 = vsyncpa [#allocation3], 1
    %s431 = scalar_lea.sflag [#allocation3], 1
    %432 = vsyncpa %s431, 1

</llo_original>
